<compile_context>
chip_gen: v7x
topology: tpu7x:2x2x1
jax: 0.10.0
libtpu: 0.0.40
codegen_flags: <defaults>
</compile_context>

<pallas_src>
import jax
import jax.numpy as jnp
from jax.experimental import pallas as pl
from jax.experimental.pallas import tpu as pltpu

LANE = 128      # lane width: last dim of every block should be a multiple
SUBLANE = 8     # sublane width: second-to-last dim multiple


def _round_up(n, m):
    return ((n + m - 1) // m) * m


def _cdiv(a, b):
    return -(-a // b)


def dautoencoder_kernel(x_ref, w1_ref, b1_ref, w2_ref, b2_ref, o_ref):
    # Cast the activation operand to the (bf16) weight dtype in-register; the
    # MXU accumulates in f32, and bias-add + tanh run in f32 on the VPU/EUP.
    x = x_ref[...].astype(w1_ref.dtype)
    h = jnp.tanh(
        jnp.dot(x, w1_ref[...], preferred_element_type=jnp.float32)
        + b1_ref[...]
    )
    y = jnp.tanh(
        jnp.dot(h.astype(w2_ref.dtype), w2_ref[...],
                preferred_element_type=jnp.float32)
        + b2_ref[...]
    )
    o_ref[...] = y.astype(o_ref.dtype)


def prepare_params(w1, b1, w2, b2, compute_dtype=jnp.bfloat16):
    """One-time (outside the hot path) transpose + lane-dense zero padding.

    w1 : (H, D_in)  PyTorch Linear layout (out, in)   -> (Dp, Hp) as (in, out)
    b1 : (H,)                                          -> (1, Hp)  (f32)
    w2 : (O, H)                                        -> (Hp, Op)
    b2 : (O,)                                          -> (1, Op)  (f32)
    """
    H, D_in = w1.shape
    O = w2.shape[0]
    Dp = _round_up(D_in, LANE)
    Hp = _round_up(H, LANE)
    Op = _round_up(O, LANE)

    w1_t = jnp.zeros((Dp, Hp), compute_dtype).at[:D_in, :H].set(
        jnp.asarray(w1, compute_dtype).T)
    b1_p = jnp.zeros((1, Hp), jnp.float32).at[:, :H].set(
        jnp.asarray(b1, jnp.float32))
    w2_t = jnp.zeros((Hp, Op), compute_dtype).at[:H, :O].set(
        jnp.asarray(w2, compute_dtype).T)
    b2_p = jnp.zeros((1, Op), jnp.float32).at[:, :O].set(
        jnp.asarray(b2, jnp.float32))

    dims = dict(D_in=D_in, H=H, O=O, Dp=Dp, Hp=Hp, Op=Op)
    return (w1_t, b1_p, w2_t, b2_p), dims


def dautoencoder_forward(x, params, dims, *, batch_tile=1024,
                         out_dtype=jnp.float32):
    """Fused two-layer tanh MLP (left branch of DAutoencoder.forward).

    x : (B, D_in) -> (B, O)
    """
    w1_t, b1_p, w2_t, b2_p = params
    D_in, O = dims["D_in"], dims["O"]
    Dp, Hp, Op = dims["Dp"], dims["Hp"], dims["Op"]

    B = x.shape[0]
    # Tile size: multiple of 8 sublanes; capped so the grid has >=2 balanced
    # steps whenever possible (keeps both v7x TensorCores busy) and never
    # exceeds the (padded) batch, so the last tile is always full.
    TB = min(_round_up(batch_tile, SUBLANE),
             max(SUBLANE, _round_up(_cdiv(B, 2), SUBLANE)))
    Bp = _round_up(B, TB)

    # Fast path: no wrapper-side pad copy when x is already tile-aligned.
    if B == Bp and D_in == Dp:
        xp = x
    elif D_in == Dp:
        # Pad only the missing batch rows (feature dim already lane-aligned).
        xp = jnp.pad(x, ((0, Bp - B), (0, 0)))
    else:
        xp = jnp.pad(x, ((0, Bp - B), (0, Dp - D_in)))

    grid = (Bp // TB,)
    grid_spec = pl.GridSpec(
        grid=grid,
        in_specs=[
            # activations: one batch tile per grid step (double-buffered)
            pl.BlockSpec((TB, Dp), lambda i: (i, 0)),
            # weights / biases: constant index_map -> VMEM-resident
            pl.BlockSpec((Dp, Hp), lambda i: (0, 0)),
            pl.BlockSpec((1, Hp), lambda i: (0, 0)),
            pl.BlockSpec((Hp, Op), lambda i: (0, 0)),
            pl.BlockSpec((1, Op), lambda i: (0, 0)),
        ],
        out_specs=pl.BlockSpec((TB, Op), lambda i: (i, 0)),
    )

    out_p = pl.pallas_call(
        dautoencoder_kernel,
        out_shape=jax.ShapeDtypeStruct((Bp, Op), out_dtype),
        grid_spec=grid_spec,
        compiler_params=pltpu.CompilerParams(
            # batch tiles are independent -> megacore sharding on v7x
            dimension_semantics=("parallel",),
        ),
    )(xp, w1_t, b1_p, w2_t, b2_p)

    # Strip batch + lane padding only if any was introduced.
    if B == Bp and O == Op:
        return out_p
    return out_p[:B, :O]


def reference_forward(x, w1, b1, w2, b2):
    # Pure-JAX f32 reference matching PyTorch semantics (Linear = x @ W.T + b)
    # with true-f32 matmul precision pinned.
    h = jnp.tanh(jnp.dot(x, w1.T, precision=jax.lax.Precision.HIGHEST) + b1)
    return jnp.tanh(jnp.dot(h, w2.T, precision=jax.lax.Precision.HIGHEST) + b2)


if __name__ == "__main__":
    # Shapes consistent with the module (non-multi-task branch):
    #   input_dim = 128, hidden_dim = 128 -> hidden_dim//2 = 64
    #   output_dim = 128 -> output_dim//2 = 64
    INPUT_DIM, HIDDEN_DIM, OUTPUT_DIM = 128, 128, 128
    H = HIDDEN_DIM // 2
    O = OUTPUT_DIM // 2

    key = jax.random.PRNGKey(0)
    kx, kw1, kb1, kw2, kb2, kx2, kx3 = jax.random.split(key, 7)

    # Deterministic PyTorch-like init: U(-1/sqrt(fan_in), 1/sqrt(fan_in))
    bound1 = 1.0 / (INPUT_DIM ** 0.5)
    bound2 = 1.0 / (H ** 0.5)
    w1 = jax.random.uniform(kw1, (H, INPUT_DIM), minval=-bound1, maxval=bound1,
                            dtype=jnp.float32)
    b1 = jax.random.uniform(kb1, (H,), minval=-bound1, maxval=bound1,
                            dtype=jnp.float32)
    w2 = jax.random.uniform(kw2, (O, H), minval=-bound2, maxval=bound2,
                            dtype=jnp.float32)
    b2 = jax.random.uniform(kb2, (O,), minval=-bound2, maxval=bound2,
                            dtype=jnp.float32)

    # One-time parameter prep (transpose + lane-dense padding, bf16 weights).
    params, dims = prepare_params(w1, b1, w2, b2)

    # bf16 MXU operands vs f32-HIGHEST reference -> relaxed tolerance.
    ATOL = RTOL = 2e-2

    # --- Case 1: small batch (single grid step) ---
    B1 = 8
    x1 = jax.random.normal(kx, (B1, INPUT_DIM), dtype=jnp.float32)
    out1 = jax.block_until_ready(dautoencoder_forward(x1, params, dims))
    ref1 = reference_forward(x1, w1, b1, w2, b2)
    assert out1.shape == (B1, O), out1.shape
    assert jnp.allclose(out1, ref1, atol=ATOL, rtol=RTOL), "mismatch (B=8)"

    # --- Case 2: non-multiple batch, multi-step pipelined grid (pads rows) ---
    B2 = 200
    x2 = jax.random.normal(kx2, (B2, INPUT_DIM), dtype=jnp.float32)
    out2 = jax.block_until_ready(
        dautoencoder_forward(x2, params, dims, batch_tile=64))
    ref2 = reference_forward(x2, w1, b1, w2, b2)
    assert out2.shape == (B2, O), out2.shape
    assert jnp.allclose(out2, ref2, atol=ATOL, rtol=RTOL), "mismatch (B=200)"

    # --- Case 3: tile-aligned batch -> no-copy fast path, 2 grid steps ---
    B3 = 256
    x3 = jax.random.normal(kx3, (B3, INPUT_DIM), dtype=jnp.float32)
    out3 = jax.block_until_ready(
        dautoencoder_forward(x3, params, dims, batch_tile=128))
    ref3 = reference_forward(x3, w1, b1, w2, b2)
    assert out3.shape == (B3, O), out3.shape
    assert jnp.allclose(out3, ref3, atol=ATOL, rtol=RTOL), "mismatch (B=256)"

    # TODO(synk): multi_task / forward_multi branch (fc3/fc4/fc5, pairwise /
    # cosine distances) and the loss=='kl' log_softmax epilogue are not
    # exercised by this default forward path and are left unimplemented.
    print("KERNEL_OK")
</pallas_src>

<mosaic_0001>
module attributes {stable_mosaic.version = 11 : i64} {
  func.func @dautoencoder_kernel(%arg0: i32, %arg1: memref<8x128xf32, #tpu.memory_space<vmem>>, %arg2: memref<128x128xbf16, #tpu.memory_space<vmem>>, %arg3: memref<1x128xf32, #tpu.memory_space<vmem>>, %arg4: memref<128x128xbf16, #tpu.memory_space<vmem>>, %arg5: memref<1x128xf32, #tpu.memory_space<vmem>>, %arg6: memref<8x128xf32, #tpu.memory_space<vmem>>) attributes {dimension_semantics = [#tpu.dimension_semantics<parallel>], iteration_bounds = array<i64: 1>, scalar_prefetch = 0 : i64, scratch_operands = 0 : i64, tpu.core_type = #tpu.core_type<tc>, window_params = [{transform_indices = @transform_0, window_bounds = array<i64: 8, 128>}, {pipeline_mode = #tpu.pipeline_mode<synchronous>, transform_indices = @transform_1, window_bounds = array<i64: 128, 128>}, {pipeline_mode = #tpu.pipeline_mode<synchronous>, transform_indices = @transform_2, window_bounds = array<i64: 1, 128>}, {pipeline_mode = #tpu.pipeline_mode<synchronous>, transform_indices = @transform_3, window_bounds = array<i64: 128, 128>}, {pipeline_mode = #tpu.pipeline_mode<synchronous>, transform_indices = @transform_4, window_bounds = array<i64: 1, 128>}, {transform_indices = @transform_5, window_bounds = array<i64: 8, 128>}]} {
    %c0 = arith.constant 0 : index
    %c0_0 = arith.constant 0 : index
    %0 = vector.load %arg1[%c0, %c0_0] : memref<8x128xf32, #tpu.memory_space<vmem>>, vector<8x128xf32>
    %1 = arith.truncf %0 : vector<8x128xf32> to vector<8x128xbf16>
    %c0_1 = arith.constant 0 : index
    %c0_2 = arith.constant 0 : index
    %2 = vector.load %arg2[%c0_1, %c0_2] : memref<128x128xbf16, #tpu.memory_space<vmem>>, vector<128x128xbf16>
    %cst = arith.constant dense<0.000000e+00> : vector<8x128xf32>
    %3 = tpu.matmul %1, %2, %cst {dimension_numbers = #tpu.dot_dimension_numbers<[1], [0], [0], [1], [0, 0, 1, 1], [], []>} : vector<8x128xbf16>, vector<128x128xbf16>, vector<8x128xf32> -> vector<8x128xf32>
    %c0_3 = arith.constant 0 : index
    %c0_4 = arith.constant 0 : index
    %4 = vector.load %arg3[%c0_3, %c0_4] : memref<1x128xf32, #tpu.memory_space<vmem>>, vector<1x128xf32>
    %5 = vector.broadcast %4 : vector<1x128xf32> to vector<8x128xf32>
    %6 = arith.addf %3, %5 : vector<8x128xf32>
    %7 = math.tanh %6 : vector<8x128xf32>
    %8 = arith.truncf %7 : vector<8x128xf32> to vector<8x128xbf16>
    %c0_5 = arith.constant 0 : index
    %c0_6 = arith.constant 0 : index
    %9 = vector.load %arg4[%c0_5, %c0_6] : memref<128x128xbf16, #tpu.memory_space<vmem>>, vector<128x128xbf16>
    %cst_7 = arith.constant dense<0.000000e+00> : vector<8x128xf32>
    %10 = tpu.matmul %8, %9, %cst_7 {dimension_numbers = #tpu.dot_dimension_numbers<[1], [0], [0], [1], [0, 0, 1, 1], [], []>} : vector<8x128xbf16>, vector<128x128xbf16>, vector<8x128xf32> -> vector<8x128xf32>
    %c0_8 = arith.constant 0 : index
    %c0_9 = arith.constant 0 : index
    %11 = vector.load %arg5[%c0_8, %c0_9] : memref<1x128xf32, #tpu.memory_space<vmem>>, vector<1x128xf32>
    %12 = vector.broadcast %11 : vector<1x128xf32> to vector<8x128xf32>
    %13 = arith.addf %10, %12 : vector<8x128xf32>
    %14 = math.tanh %13 : vector<8x128xf32>
    %c0_10 = arith.constant 0 : index
    %c0_11 = arith.constant 0 : index
    %15 = vector.load %arg6[%c0_10, %c0_11] : memref<8x128xf32, #tpu.memory_space<vmem>>, vector<8x128xf32>
    tpu.vector_store %arg6[%c0_10, %c0_11], %14 {strides = array<i32>} : memref<8x128xf32, #tpu.memory_space<vmem>>, vector<8x128xf32>,
    return
  }
  func.func @transform_0(%arg0: i32) -> (i32, i32) {
    %c0_i32 = arith.constant 0 : i32
    %c0_i32_0 = arith.constant 0 : i32
    return %arg0, %c0_i32 : i32, i32
  }
  func.func @transform_1(%arg0: i32) -> (i32, i32) {
    %c0_i32 = arith.constant 0 : i32
    %c0_i32_0 = arith.constant 0 : i32
    %c0_i32_1 = arith.constant 0 : i32
    return %c0_i32, %c0_i32_0 : i32, i32
  }
  func.func @transform_2(%arg0: i32) -> (i32, i32) {
    %c0_i32 = arith.constant 0 : i32
    %c0_i32_0 = arith.constant 0 : i32
    %c0_i32_1 = arith.constant 0 : i32
    return %c0_i32, %c0_i32_0 : i32, i32
  }
  func.func @transform_3(%arg0: i32) -> (i32, i32) {
    %c0_i32 = arith.constant 0 : i32
    %c0_i32_0 = arith.constant 0 : i32
    %c0_i32_1 = arith.constant 0 : i32
    return %c0_i32, %c0_i32_0 : i32, i32
  }
  func.func @transform_4(%arg0: i32) -> (i32, i32) {
    %c0_i32 = arith.constant 0 : i32
    %c0_i32_0 = arith.constant 0 : i32
    %c0_i32_1 = arith.constant 0 : i32
    return %c0_i32, %c0_i32_0 : i32, i32
  }
  func.func @transform_5(%arg0: i32) -> (i32, i32) {
    %c0_i32 = arith.constant 0 : i32
    %c0_i32_0 = arith.constant 0 : i32
    return %arg0, %c0_i32 : i32, i32
  }
}

</mosaic_0001>

<llo_original>
// kernel: tpu_custom_call.1
$region0: #{tpu_custom_call.1}
  #allocation0 [shape = 'u32[]', space=smem, size = 0x4, offset = 0x4, fixed_abs, tag = 'smem constant byte address 0x4 - core index']
  #allocation1 [shape = 'u32[144,128]{1,0:T(1,128)}', space=vmem, size = 0x12000, scoped, tag = 'internal scratch']
  %s0 = inlined_call_operand.hbm [shape: f32[8,128], index: 0, kind: input, shape index: {}]
  %s1 = inlined_call_operand.hbm [shape: bf16[128,128], index: 1, kind: input, shape index: {}]
  %s2 = inlined_call_operand.vmem [shape: f32[1,128], index: 2, kind: input, shape index: {}]
  %s3 = inlined_call_operand.hbm [shape: bf16[128,128], index: 3, kind: input, shape index: {}]
  %s4 = inlined_call_operand.vmem [shape: f32[1,128], index: 4, kind: input, shape index: {}]
  %s5 = inlined_call_operand.hbm [shape: f32[8,128], index: 5, kind: output, shape index: {}]
  %s6 = sld [smem:[#allocation0]]
  $region42: #{tpu_custom_call.1} parent=0
    _
  %s8 = ssub.s32 1, %s6
  %s9 = scalar_select 0, %s8, %s6
  $region1: #{tpu_custom_call.1} parent=0
    #allocation2 [shape = 'u8[4096]{0}', space=vmem, size = 0x1000, scoped, tag = 'input window, operand 0, single buffered']
    #allocation3 [shape = 's32[1]{0}', space=sflag, size = 0x4, scoped, tag = 'scoped memory for tpu_custom_call.1']
    #allocation4 [shape = 's32[1]{0}', space=sflag, size = 0x4, scoped, tag = 'scoped memory for tpu_custom_call.1']
    #allocation5 [shape = 'u8[32768]{0}', space=vmem, size = 0x8000, scoped, tag = 'input window, operand 1, single buffered']
    #allocation6 [shape = 's32[1]{0}', space=sflag, size = 0x4, scoped, tag = 'scoped memory for tpu_custom_call.1']
    #allocation7 [shape = 'u8[32768]{0}', space=vmem, size = 0x8000, scoped, tag = 'input window, operand 3, single buffered']
    #allocation8 [shape = 'u8[4096]{0}', space=vmem, size = 0x1000, scoped, tag = 'output window, operand 0, single buffered']
    %10 = vsyncpa [#allocation3], 0
    %11 = vsyncpa [#allocation6], 0
    %12 = vsyncpa [#allocation4], 0
    // Predicated region
    $region2: #{tpu_custom_call.1} parent=1 // pred_check
      _
    $region3: #{tpu_custom_call.1} parent=1 // pred_check_branch
      %14 = sbr.rel (0) target = $region5
    $region4: #{tpu_custom_call.1} parent=1 // pred_region
      %s16 = ssub.s32 128, 128
      %17 = vsyncadd [#allocation3], %s16
      %s19 = sshll.u32 [#allocation2], 4
      %s20 = int_to_ptr.vmem [resolvable:$true] %s19
      %22 = dma.hbm_to_vmem [thread:$0]  %s0, 128, %s20, [#allocation3]
    $region5: #{tpu_custom_call.1} parent=1 // pred_fallthru
      _
    // Predicated region
    $region6: #{tpu_custom_call.1} parent=1 // pred_check
      _
    $region7: #{tpu_custom_call.1} parent=1 // pred_check_branch
      %24 = sbr.rel (0) target = $region9
    $region8: #{tpu_custom_call.1} parent=1 // pred_region
      %s26 = ssub.s32 1024, 1024
      %27 = vsyncadd [#allocation6], %s26
      %s28 = sshll.u32 [#allocation5], 4
      %s29 = int_to_ptr.vmem [resolvable:$true] %s28
      %34 = dma.hbm_to_vmem [thread:$0]  %s1, 1024, %s29, [#allocation6], 64, 64, 4
    $region9: #{tpu_custom_call.1} parent=1 // pred_fallthru
      _
    // Predicated region
    $region10: #{tpu_custom_call.1} parent=1 // pred_check
      _
    $region11: #{tpu_custom_call.1} parent=1 // pred_check_branch
      %36 = sbr.rel (0) target = $region13
    $region12: #{tpu_custom_call.1} parent=1 // pred_region
      _
    $region13: #{tpu_custom_call.1} parent=1 // pred_fallthru
      _
    // Predicated region
    $region14: #{tpu_custom_call.1} parent=1 // pred_check
      _
    $region15: #{tpu_custom_call.1} parent=1 // pred_check_branch
      %38 = sbr.rel (0) target = $region17
    $region16: #{tpu_custom_call.1} parent=1 // pred_region
      %s40 = ssub.s32 1024, 1024
      %41 = vsyncadd [#allocation6], %s40
      %s42 = sshll.u32 [#allocation7], 4
      %s43 = int_to_ptr.vmem [resolvable:$true] %s42
      %48 = dma.hbm_to_vmem [thread:$0]  %s3, 1024, %s43, [#allocation6], 64, 64, 4
    $region17: #{tpu_custom_call.1} parent=1 // pred_fallthru
      _
    // Predicated region
    $region18: #{tpu_custom_call.1} parent=1 // pred_check
      _
    $region19: #{tpu_custom_call.1} parent=1 // pred_check_branch
      %50 = sbr.rel (0) target = $region21
    $region20: #{tpu_custom_call.1} parent=1 // pred_region
      _
    $region21: #{tpu_custom_call.1} parent=1 // pred_fallthru
      _
    // Predicated region
    $region22: #{tpu_custom_call.1} parent=1 // pred_check
      _
    $region23: #{tpu_custom_call.1} parent=1 // pred_check_branch
      %52 = sbr.rel (0) target = $region25
    $region24: #{tpu_custom_call.1} parent=1 // pred_region
      %53 = dma.done [#allocation3], 128
    $region25: #{tpu_custom_call.1} parent=1 // pred_fallthru
      _
    // Predicated region
    $region26: #{tpu_custom_call.1} parent=1 // pred_check
      _
    $region27: #{tpu_custom_call.1} parent=1 // pred_check_branch
      %55 = sbr.rel (0) target = $region29
    $region28: #{tpu_custom_call.1} parent=1 // pred_region
      %56 = dma.done [#allocation6], 1024
    $region29: #{tpu_custom_call.1} parent=1 // pred_fallthru
      _
    // Predicated region
    $region30: #{tpu_custom_call.1} parent=1 // pred_check
      _
    $region31: #{tpu_custom_call.1} parent=1 // pred_check_branch
      %58 = sbr.rel (0) target = $region33
    $region32: #{tpu_custom_call.1} parent=1 // pred_region
      %59 = dma.done [#allocation6], 1024
    $region33: #{tpu_custom_call.1} parent=1 // pred_fallthru
      _
    %v61 = vld [vmem:[#allocation2] sm:$0xff]
    %v62 = vpack.c.bf16 %v61, %v61
    %v63 = vld [vmem:[#allocation5] sm:$0xf]
    %v64 = vld [vmem:[#allocation5 + $0x4] sm:$0xf]
    %v65 = vld [vmem:[#allocation5 + $0x8] sm:$0xf]
    %v66 = vld [vmem:[#allocation5 + $0xc] sm:$0xf]
    %v67 = vld [vmem:[#allocation5 + $0x10] sm:$0xf]
    %v68 = vld [vmem:[#allocation5 + $0x14] sm:$0xf]
    %v69 = vld [vmem:[#allocation5 + $0x18] sm:$0xf]
    %v70 = vld [vmem:[#allocation5 + $0x1c] sm:$0xf]
    %v71 = vld [vmem:[#allocation5 + $0x20] sm:$0xf]
    %v72 = vld [vmem:[#allocation5 + $0x24] sm:$0xf]
    %v73 = vld [vmem:[#allocation5 + $0x28] sm:$0xf]
    %v74 = vld [vmem:[#allocation5 + $0x2c] sm:$0xf]
    %v75 = vld [vmem:[#allocation5 + $0x30] sm:$0xf]
    %v76 = vld [vmem:[#allocation5 + $0x34] sm:$0xf]
    %v77 = vld [vmem:[#allocation5 + $0x38] sm:$0xf]
    %v78 = vld [vmem:[#allocation5 + $0x3c] sm:$0xf]
    %v79 = vld [vmem:[%s2] sm:$0x1]
    %v81 = vlaneseq
    %v82 = vshrl.u32 %v81, 7
    %v83 = vsub.s32 0, %v82
    %v84 = vrot.slane %v79, %v83
    %v102 = vunpack.c.l.b16 %v63
    %v103 = vunpack.c.l.b16 %v64
    %v104 = vunpack.c.l.b16 %v65
    %v105 = vunpack.c.l.b16 %v66
    %v106 = vunpack.c.l.b16 %v67
    %v107 = vunpack.c.l.b16 %v68
    %v108 = vunpack.c.l.b16 %v69
    %v109 = vunpack.c.l.b16 %v70
    %v110 = vunpack.c.l.b16 %v71
    %v111 = vunpack.c.l.b16 %v72
    %v112 = vunpack.c.l.b16 %v73
    %v113 = vunpack.c.l.b16 %v74
    %v114 = vunpack.c.l.b16 %v75
    %v115 = vunpack.c.l.b16 %v76
    %v116 = vunpack.c.l.b16 %v77
    %v117 = vunpack.c.l.b16 %v78
    %v118 = vpack.c.b16 %v103, %v102
    %v119 = vpack.c.b16 %v105, %v104
    %v120 = vpack.c.b16 %v107, %v106
    %v121 = vpack.c.b16 %v109, %v108
    %v122 = vpack.c.b16 %v111, %v110
    %v123 = vpack.c.b16 %v113, %v112
    %v124 = vpack.c.b16 %v115, %v114
    %v125 = vpack.c.b16 %v117, %v116
    %134 = vmatprep.subr.bf16.mxu0 0
    %135 = vmatpush1.bf16.msra.mxu0 %v118
    %136 = vmatprep.subr.bf16.mxu0 0
    %137 = vmatpush1.bf16.msra.mxu0 %v119
    %138 = vmatprep.subr.bf16.mxu0 0
    %139 = vmatpush1.bf16.msra.mxu0 %v120
    %140 = vmatprep.subr.bf16.mxu0 0
    %141 = vmatpush1.bf16.msra.mxu0 %v121
    %142 = vmatprep.subr.bf16.mxu0 0
    %143 = vmatpush1.bf16.msra.mxu0 %v122
    %144 = vmatprep.subr.bf16.mxu0 0
    %145 = vmatpush1.bf16.msra.mxu0 %v123
    %146 = vmatprep.subr.bf16.mxu0 0
    %147 = vmatpush1.bf16.msra.mxu0 %v124
    %148 = vmatprep.subr.bf16.mxu0 0
    %149 = vmatpush1.bf16.msra.mxu0 %v125
    %150 = vmatprep.subr.bf16.mxu0 0
    %151 = vmatpush1.bf16.msra.mxu0 0
    %152 = vmatprep.subr.bf16.mxu0 0
    %153 = vmatpush1.bf16.msra.mxu0 0
    %154 = vmatprep.subr.bf16.mxu0 0
    %155 = vmatpush1.bf16.msra.mxu0 0
    %156 = vmatprep.subr.bf16.mxu0 0
    %157 = vmatpush1.bf16.msra.mxu0 0
    %158 = vmatprep.subr.bf16.mxu0 0
    %159 = vmatpush1.bf16.msra.mxu0 0
    %160 = vmatprep.subr.bf16.mxu0 0
    %161 = vmatpush1.bf16.msra.mxu0 0
    %162 = vmatprep.subr.bf16.mxu0 0
    %163 = vmatpush1.bf16.msra.mxu0 0
    %164 = vmatprep.subr.bf16.mxu0 0
    %165 = vmatpush1.bf16.msra.mxu0 0
    %166 = vmatprep.mubr.bf16.mxu0 0
    %167 = vmatmul.mubr.bf16.gmra.mrb[0].mxu0 %v62
    %v168 = vpop.f32.mrb[0].mxu0
    %v169 = vadd.f32 %v84, %v168
    %v170 = vpop.f32.mrb[0].mxu0
    %v171 = vpop.f32.mrb[0].mxu0
    %v172 = vpop.f32.mrb[0].mxu0
    %173 = vdwg.mxu0
    %v174 = vtanh.pop %v169
    %v175 = vpack.c.bf16 %v174, %v174
    %v176 = vld [vmem:[#allocation7] sm:$0xf]
    %v177 = vld [vmem:[#allocation7 + $0x4] sm:$0xf]
    %v178 = vld [vmem:[#allocation7 + $0x8] sm:$0xf]
    %v179 = vld [vmem:[#allocation7 + $0xc] sm:$0xf]
    %v180 = vld [vmem:[#allocation7 + $0x10] sm:$0xf]
    %v181 = vld [vmem:[#allocation7 + $0x14] sm:$0xf]
    %v182 = vld [vmem:[#allocation7 + $0x18] sm:$0xf]
    %v183 = vld [vmem:[#allocation7 + $0x1c] sm:$0xf]
    %v184 = vld [vmem:[#allocation7 + $0x20] sm:$0xf]
    %v185 = vld [vmem:[#allocation7 + $0x24] sm:$0xf]
    %v186 = vld [vmem:[#allocation7 + $0x28] sm:$0xf]
    %v187 = vld [vmem:[#allocation7 + $0x2c] sm:$0xf]
    %v188 = vld [vmem:[#allocation7 + $0x30] sm:$0xf]
    %v189 = vld [vmem:[#allocation7 + $0x34] sm:$0xf]
    %v190 = vld [vmem:[#allocation7 + $0x38] sm:$0xf]
    %v191 = vld [vmem:[#allocation7 + $0x3c] sm:$0xf]
    %v192 = vld [vmem:[%s4] sm:$0x1]
    %v194 = vlaneseq
    %v195 = vshrl.u32 %v194, 7
    %v196 = vsub.s32 0, %v195
    %v197 = vrot.slane %v192, %v196
    %v215 = vunpack.c.l.b16 %v176
    %v216 = vunpack.c.l.b16 %v177
    %v217 = vunpack.c.l.b16 %v178
    %v218 = vunpack.c.l.b16 %v179
    %v219 = vunpack.c.l.b16 %v180
    %v220 = vunpack.c.l.b16 %v181
    %v221 = vunpack.c.l.b16 %v182
    %v222 = vunpack.c.l.b16 %v183
    %v223 = vunpack.c.l.b16 %v184
    %v224 = vunpack.c.l.b16 %v185
    %v225 = vunpack.c.l.b16 %v186
    %v226 = vunpack.c.l.b16 %v187
    %v227 = vunpack.c.l.b16 %v188
    %v228 = vunpack.c.l.b16 %v189
    %v229 = vunpack.c.l.b16 %v190
    %v230 = vunpack.c.l.b16 %v191
    %v231 = vpack.c.b16 %v216, %v215
    %v232 = vpack.c.b16 %v218, %v217
    %v233 = vpack.c.b16 %v220, %v219
    %v234 = vpack.c.b16 %v222, %v221
    %v235 = vpack.c.b16 %v224, %v223
    %v236 = vpack.c.b16 %v226, %v225
    %v237 = vpack.c.b16 %v228, %v227
    %v238 = vpack.c.b16 %v230, %v229
    %247 = vmatprep.subr.bf16.mxu0 0
    %248 = vmatpush1.bf16.msra.mxu0 %v231
    %249 = vmatprep.subr.bf16.mxu0 0
    %250 = vmatpush1.bf16.msra.mxu0 %v232
    %251 = vmatprep.subr.bf16.mxu0 0
    %252 = vmatpush1.bf16.msra.mxu0 %v233
    %253 = vmatprep.subr.bf16.mxu0 0
    %254 = vmatpush1.bf16.msra.mxu0 %v234
    %255 = vmatprep.subr.bf16.mxu0 0
    %256 = vmatpush1.bf16.msra.mxu0 %v235
    %257 = vmatprep.subr.bf16.mxu0 0
    %258 = vmatpush1.bf16.msra.mxu0 %v236
    %259 = vmatprep.subr.bf16.mxu0 0
    %260 = vmatpush1.bf16.msra.mxu0 %v237
    %261 = vmatprep.subr.bf16.mxu0 0
    %262 = vmatpush1.bf16.msra.mxu0 %v238
    %263 = vmatprep.subr.bf16.mxu0 0
    %264 = vmatpush1.bf16.msra.mxu0 0
    %265 = vmatprep.subr.bf16.mxu0 0
    %266 = vmatpush1.bf16.msra.mxu0 0
    %267 = vmatprep.subr.bf16.mxu0 0
    %268 = vmatpush1.bf16.msra.mxu0 0
    %269 = vmatprep.subr.bf16.mxu0 0
    %270 = vmatpush1.bf16.msra.mxu0 0
    %271 = vmatprep.subr.bf16.mxu0 0
    %272 = vmatpush1.bf16.msra.mxu0 0
    %273 = vmatprep.subr.bf16.mxu0 0
    %274 = vmatpush1.bf16.msra.mxu0 0
    %275 = vmatprep.subr.bf16.mxu0 0
    %276 = vmatpush1.bf16.msra.mxu0 0
    %277 = vmatprep.subr.bf16.mxu0 0
    %278 = vmatpush1.bf16.msra.mxu0 0
    %279 = vmatprep.mubr.bf16.mxu0 0
    %280 = vmatmul.mubr.bf16.gmra.mrb[0].mxu0 %v175
    %v281 = vpop.f32.mrb[0].mxu0
    %v282 = vadd.f32 %v197, %v281
    %v283 = vpop.f32.mrb[0].mxu0
    %v284 = vpop.f32.mrb[0].mxu0
    %v285 = vpop.f32.mrb[0].mxu0
    %286 = vdwg.mxu0
    %v287 = vtanh.pop %v282
    %288 = vst [vmem:[#allocation8] sm:$0xff] %v287
    // Predicated region
    $region34: #{tpu_custom_call.1} parent=1 // pred_check
      _
    $region35: #{tpu_custom_call.1} parent=1 // pred_check_branch
      %290 = sbr.rel (0) target = $region37
    $region36: #{tpu_custom_call.1} parent=1 // pred_region
      %s292 = ssub.s32 128, 128
      %293 = vsyncadd [#allocation4], %s292
      %s295 = sshll.u32 [#allocation8], 4
      %s296 = int_to_ptr.vmem [resolvable:$true] %s295
      %298 = dma.vmem_to_hbm [thread:$0]  %s296, 128, %s5, [#allocation4]
    $region37: #{tpu_custom_call.1} parent=1 // pred_fallthru
      _
    // Predicated region
    $region38: #{tpu_custom_call.1} parent=1 // pred_check
      _
    $region39: #{tpu_custom_call.1} parent=1 // pred_check_branch
      %300 = sbr.rel (0) target = $region41
    $region40: #{tpu_custom_call.1} parent=1 // pred_region
      %301 = dma.done [#allocation4], 128
    $region41: #{tpu_custom_call.1} parent=1 // pred_fallthru
      _
    %302 = vsyncpa [#allocation3], 1
    %303 = vsyncpa [#allocation6], 1
    %304 = vsyncpa [#allocation4], 1

</llo_original>
